<compile_context>
chip_gen: v5e
topology: v5e:2x2
jax: 0.10.0
libtpu: 0.0.40
codegen_flags: <defaults>
</compile_context>

<pallas_src>
import math
from typing import NamedTuple

import jax
import jax.numpy as jnp
from jax.experimental import pallas as pl
from jax.experimental.pallas import tpu as pltpu


def _round_up(x, m):
    return (x + m - 1) // m * m


class PackedGRUParams(NamedTuple):
    wx: jax.Array        # (input_size, 3*Hp)  matmul dtype, per-gate lane-padded
    wh: jax.Array        # (Hp, 3*Hp)          matmul dtype, rows padded to Hp
    bx: jax.Array        # (1, 3*Hp) f32 : [bx_r+bh_r, bx_z+bh_z, bx_n]
    bhn: jax.Array       # (1, Hp)   f32 : bh_n (kept separate for the reset-gate mul)
    hidden_size: int
    hidden_pad: int


def pack_gru_params(w_x2h, b_x2h, w_h2h, b_h2h, *, matmul_dtype=jnp.bfloat16):
    """One-time packing of PyTorch-layout GRUCell parameters.

    Do this once at parameter-load time (outside any timestep loop): it removes
    per-step weight transposes and lane-aligns every gate to a 128-wide block.
    """
    w_x2h = jnp.asarray(w_x2h)
    w_h2h = jnp.asarray(w_h2h)
    b_x2h = jnp.asarray(b_x2h, dtype=jnp.float32)
    b_h2h = jnp.asarray(b_h2h, dtype=jnp.float32)

    three_h = w_x2h.shape[0]
    H = three_h // 3
    Hp = _round_up(H, 128)

    def pad_gate_cols(w_t):  # (K, 3H) -> (K, 3*Hp): each gate column block padded to Hp
        parts = [jnp.pad(w_t[:, g * H:(g + 1) * H], ((0, 0), (0, Hp - H)))
                 for g in range(3)]
        return jnp.concatenate(parts, axis=1)

    wx = pad_gate_cols(w_x2h.T).astype(matmul_dtype)          # (input_size, 3*Hp)
    wh = pad_gate_cols(w_h2h.T)                                # (H, 3*Hp)
    # Pad the contracting (row) dim of Wh to Hp so it matches the lane-padded
    # hidden state inside the kernel.  The extra rows multiply zero h lanes.
    wh = jnp.pad(wh, ((0, Hp - H), (0, 0))).astype(matmul_dtype)  # (Hp, 3*Hp)

    bx_r, bx_z, bx_n = b_x2h[:H], b_x2h[H:2 * H], b_x2h[2 * H:]
    bh_r, bh_z, bh_n = b_h2h[:H], b_h2h[H:2 * H], b_h2h[2 * H:]
    pad = lambda b: jnp.pad(b, (0, Hp - H))
    bx = jnp.concatenate([pad(bx_r + bh_r), pad(bx_z + bh_z), pad(bx_n)])[None, :]
    bhn = pad(bh_n)[None, :]
    return PackedGRUParams(wx, wh, bx.astype(jnp.float32), bhn.astype(jnp.float32),
                           H, Hp)


def _gru_cell_kernel(x_ref, h_ref, wx_ref, wh_ref, bx_ref, bhn_ref, out_ref):
    Hp = out_ref.shape[-1]
    mm_dtype = wx_ref.dtype

    x = x_ref[...]                      # (tb, input_size), f32
    h = h_ref[...]                      # (tb, Hp), f32; padded lanes are zero

    # MXU: (bf16|f32) operands, f32 accumulate.  Gate math stays f32.
    gate_x = jnp.dot(x.astype(mm_dtype), wx_ref[...],
                     preferred_element_type=jnp.float32) + bx_ref[...]
    gate_h = jnp.dot(h.astype(mm_dtype), wh_ref[...],
                     preferred_element_type=jnp.float32)

    # Each gate occupies its own lane-aligned Hp-wide block -> cheap slices.
    i_r, i_z, i_n = gate_x[:, :Hp], gate_x[:, Hp:2 * Hp], gate_x[:, 2 * Hp:]
    h_r, h_z, h_n = gate_h[:, :Hp], gate_h[:, Hp:2 * Hp], gate_h[:, 2 * Hp:]

    resetgate = jax.nn.sigmoid(i_r + h_r)     # r/z biases pre-combined into bx
    inputgate = jax.nn.sigmoid(i_z + h_z)
    newgate = jnp.tanh(i_n + resetgate * (h_n + bhn_ref[...]))
    hy = newgate + inputgate * (h - newgate)

    out_ref[...] = hy.astype(out_ref.dtype)   # lane-dense store (last dim = Hp)


def gru_cell(x, hidden, params: PackedGRUParams, *, block_b=256,
             vmem_limit_bytes=None):
    """Pallas GRUCell forward.

    x       : (B, input_size)  float32
    hidden  : (B, hidden_size) float32
    params  : PackedGRUParams from pack_gru_params()
    returns : (B, hidden_size)
    """
    B, input_size = x.shape
    H, Hp = params.hidden_size, params.hidden_pad
    assert hidden.shape == (B, H)

    # Batch tiling: one tile if it fits, else block_b-row tiles (multiple of 8).
    if B <= block_b:
        tb, Bp = B, B
    else:
        tb = block_b
        Bp = _round_up(B, tb)

    x_p = jnp.pad(x, ((0, Bp - B), (0, 0))) if Bp != B else x
    h_p = jnp.pad(hidden, ((0, Bp - B), (0, Hp - H)))   # lane-pad hidden to Hp

    out = pl.pallas_call(
        _gru_cell_kernel,
        out_shape=jax.ShapeDtypeStruct((Bp, Hp), x.dtype),
        grid=(Bp // tb,),
        in_specs=[
            pl.BlockSpec((tb, input_size), lambda i: (i, 0)),      # x tile
            pl.BlockSpec((tb, Hp), lambda i: (i, 0)),              # hidden tile
            pl.BlockSpec((input_size, 3 * Hp), lambda i: (0, 0)),  # Wx (resident)
            pl.BlockSpec((Hp, 3 * Hp), lambda i: (0, 0)),          # Wh (resident)
            pl.BlockSpec((1, 3 * Hp), lambda i: (0, 0)),           # combined bias
            pl.BlockSpec((1, Hp), lambda i: (0, 0)),               # bh_n
        ],
        out_specs=pl.BlockSpec((tb, Hp), lambda i: (i, 0)),
        compiler_params=pltpu.CompilerParams(
            dimension_semantics=("parallel",),
            vmem_limit_bytes=vmem_limit_bytes,
        ),
    )(x_p, h_p, params.wx, params.wh, params.bx, params.bhn)

    return out[:B, :H]


def gru_cell_ref(x, hidden, w_x2h, b_x2h, w_h2h, b_h2h):
    """Pure-JAX f32 reference mirroring the PyTorch forward."""
    gate_x = x @ w_x2h.T + b_x2h
    gate_h = hidden @ w_h2h.T + b_h2h
    H = hidden.shape[1]
    i_r, i_i, i_n = gate_x[:, :H], gate_x[:, H:2 * H], gate_x[:, 2 * H:]
    h_r, h_i, h_n = gate_h[:, :H], gate_h[:, H:2 * H], gate_h[:, 2 * H:]
    resetgate = jax.nn.sigmoid(i_r + h_r)
    inputgate = jax.nn.sigmoid(i_i + h_i)
    newgate = jnp.tanh(i_n + resetgate * h_n)
    return newgate + inputgate * (hidden - newgate)


if __name__ == "__main__":
    batch = 8
    input_size = 16
    hidden_size = 32

    key = jax.random.PRNGKey(0)
    k_x, k_h, k_wx, k_bx, k_wh, k_bh = jax.random.split(key, 6)

    # Deterministic init matching reset_parameters(): U(-stdv, stdv), stdv=1/sqrt(H).
    stdv = 1.0 / math.sqrt(hidden_size)
    w_x2h = jax.random.uniform(k_wx, (3 * hidden_size, input_size),
                               minval=-stdv, maxval=stdv, dtype=jnp.float32)
    b_x2h = jax.random.uniform(k_bx, (3 * hidden_size,),
                               minval=-stdv, maxval=stdv, dtype=jnp.float32)
    w_h2h = jax.random.uniform(k_wh, (3 * hidden_size, hidden_size),
                               minval=-stdv, maxval=stdv, dtype=jnp.float32)
    b_h2h = jax.random.uniform(k_bh, (3 * hidden_size,),
                               minval=-stdv, maxval=stdv, dtype=jnp.float32)

    x = jax.random.normal(k_x, (batch, input_size), dtype=jnp.float32)
    hidden = jax.random.normal(k_h, (batch, hidden_size), dtype=jnp.float32)

    ref = gru_cell_ref(x, hidden, w_x2h, b_x2h, w_h2h, b_h2h)

    # f32-matmul path: tight numerical check (proves gate formula / packing).
    p_f32 = pack_gru_params(w_x2h, b_x2h, w_h2h, b_h2h, matmul_dtype=jnp.float32)
    out_f32 = jax.block_until_ready(gru_cell(x, hidden, p_f32))
    assert out_f32.shape == (batch, hidden_size)
    assert jnp.allclose(out_f32, ref, atol=1e-5, rtol=1e-5), "f32 path mismatch"

    # bf16-matmul / f32-accumulate path (v6e/v7x fast path): looser tolerance.
    p_bf16 = pack_gru_params(w_x2h, b_x2h, w_h2h, b_h2h, matmul_dtype=jnp.bfloat16)
    out_bf16 = jax.block_until_ready(gru_cell(x, hidden, p_bf16))
    assert out_bf16.shape == (batch, hidden_size)
    assert jnp.allclose(out_bf16, ref, atol=5e-2, rtol=0), "bf16 path mismatch"

    print("KERNEL_OK")
</pallas_src>

<mosaic_0001>
module attributes {stable_mosaic.version = 11 : i64} {
  func.func @_gru_cell_kernel(%arg0: i32, %arg1: memref<8x16xf32, #tpu.memory_space<vmem>>, %arg2: memref<8x128xf32, #tpu.memory_space<vmem>>, %arg3: memref<16x384xf32, #tpu.memory_space<vmem>>, %arg4: memref<128x384xf32, #tpu.memory_space<vmem>>, %arg5: memref<1x384xf32, #tpu.memory_space<vmem>>, %arg6: memref<1x128xf32, #tpu.memory_space<vmem>>, %arg7: memref<8x128xf32, #tpu.memory_space<vmem>>) attributes {dimension_semantics = [#tpu.dimension_semantics<parallel>], iteration_bounds = array<i64: 1>, scalar_prefetch = 0 : i64, scratch_operands = 0 : i64, tpu.core_type = #tpu.core_type<tc>, window_params = [{transform_indices = @transform_0, window_bounds = array<i64: 8, 16>}, {transform_indices = @transform_1, window_bounds = array<i64: 8, 128>}, {pipeline_mode = #tpu.pipeline_mode<synchronous>, transform_indices = @transform_2, window_bounds = array<i64: 16, 384>}, {pipeline_mode = #tpu.pipeline_mode<synchronous>, transform_indices = @transform_3, window_bounds = array<i64: 128, 384>}, {pipeline_mode = #tpu.pipeline_mode<synchronous>, transform_indices = @transform_4, window_bounds = array<i64: 1, 384>}, {pipeline_mode = #tpu.pipeline_mode<synchronous>, transform_indices = @transform_5, window_bounds = array<i64: 1, 128>}, {transform_indices = @transform_6, window_bounds = array<i64: 8, 128>}]} {
    %c0 = arith.constant 0 : index
    %c0_0 = arith.constant 0 : index
    %0 = vector.load %arg1[%c0, %c0_0] : memref<8x16xf32, #tpu.memory_space<vmem>>, vector<8x16xf32>
    %c0_1 = arith.constant 0 : index
    %c0_2 = arith.constant 0 : index
    %1 = vector.load %arg2[%c0_1, %c0_2] : memref<8x128xf32, #tpu.memory_space<vmem>>, vector<8x128xf32>
    %c0_3 = arith.constant 0 : index
    %c0_4 = arith.constant 0 : index
    %2 = vector.load %arg3[%c0_3, %c0_4] : memref<16x384xf32, #tpu.memory_space<vmem>>, vector<16x384xf32>
    %cst = arith.constant dense<0.000000e+00> : vector<8x384xf32>
    %3 = tpu.matmul %0, %2, %cst {dimension_numbers = #tpu.dot_dimension_numbers<[1], [0], [0], [1], [0, 0, 1, 1], [], []>} : vector<8x16xf32>, vector<16x384xf32>, vector<8x384xf32> -> vector<8x384xf32>
    %c0_5 = arith.constant 0 : index
    %c0_6 = arith.constant 0 : index
    %4 = vector.load %arg5[%c0_5, %c0_6] : memref<1x384xf32, #tpu.memory_space<vmem>>, vector<1x384xf32>
    %5 = vector.broadcast %4 : vector<1x384xf32> to vector<8x384xf32>
    %6 = arith.addf %3, %5 : vector<8x384xf32>
    %c0_7 = arith.constant 0 : index
    %c0_8 = arith.constant 0 : index
    %7 = vector.load %arg4[%c0_7, %c0_8] : memref<128x384xf32, #tpu.memory_space<vmem>>, vector<128x384xf32>
    %cst_9 = arith.constant dense<0.000000e+00> : vector<8x384xf32>
    %8 = tpu.matmul %1, %7, %cst_9 {dimension_numbers = #tpu.dot_dimension_numbers<[1], [0], [0], [1], [0, 0, 1, 1], [], []>} : vector<8x128xf32>, vector<128x384xf32>, vector<8x384xf32> -> vector<8x384xf32>
    %9 = vector.extract_strided_slice %6 {offsets = [0, 0], sizes = [8, 128], strides = [1, 1]} : vector<8x384xf32> to vector<8x128xf32>
    %10 = vector.extract_strided_slice %6 {offsets = [0, 128], sizes = [8, 128], strides = [1, 1]} : vector<8x384xf32> to vector<8x128xf32>
    %11 = vector.extract_strided_slice %6 {offsets = [0, 256], sizes = [8, 128], strides = [1, 1]} : vector<8x384xf32> to vector<8x128xf32>
    %12 = vector.extract_strided_slice %8 {offsets = [0, 0], sizes = [8, 128], strides = [1, 1]} : vector<8x384xf32> to vector<8x128xf32>
    %13 = vector.extract_strided_slice %8 {offsets = [0, 128], sizes = [8, 128], strides = [1, 1]} : vector<8x384xf32> to vector<8x128xf32>
    %14 = vector.extract_strided_slice %8 {offsets = [0, 256], sizes = [8, 128], strides = [1, 1]} : vector<8x384xf32> to vector<8x128xf32>
    %15 = arith.addf %9, %12 : vector<8x128xf32>
    %16 = arith.negf %15 : vector<8x128xf32>
    %17 = math.exp %16 : vector<8x128xf32>
    %cst_10 = arith.constant 1.000000e+00 : f32
    %18 = vector.broadcast %cst_10 : f32 to vector<8x128xf32>
    %19 = arith.addf %18, %17 : vector<8x128xf32>
    %20 = arith.divf %18, %19 : vector<8x128xf32>
    %21 = arith.addf %10, %13 : vector<8x128xf32>
    %22 = arith.negf %21 : vector<8x128xf32>
    %23 = math.exp %22 : vector<8x128xf32>
    %cst_11 = arith.constant 1.000000e+00 : f32
    %24 = vector.broadcast %cst_11 : f32 to vector<8x128xf32>
    %25 = arith.addf %24, %23 : vector<8x128xf32>
    %26 = arith.divf %24, %25 : vector<8x128xf32>
    %c0_12 = arith.constant 0 : index
    %c0_13 = arith.constant 0 : index
    %27 = vector.load %arg6[%c0_12, %c0_13] : memref<1x128xf32, #tpu.memory_space<vmem>>, vector<1x128xf32>
    %28 = vector.broadcast %27 : vector<1x128xf32> to vector<8x128xf32>
    %29 = arith.addf %14, %28 : vector<8x128xf32>
    %30 = arith.mulf %20, %29 : vector<8x128xf32>
    %31 = arith.addf %11, %30 : vector<8x128xf32>
    %32 = math.tanh %31 : vector<8x128xf32>
    %33 = arith.subf %1, %32 : vector<8x128xf32>
    %34 = arith.mulf %26, %33 : vector<8x128xf32>
    %35 = arith.addf %32, %34 : vector<8x128xf32>
    %c0_14 = arith.constant 0 : index
    %c0_15 = arith.constant 0 : index
    %36 = vector.load %arg7[%c0_14, %c0_15] : memref<8x128xf32, #tpu.memory_space<vmem>>, vector<8x128xf32>
    tpu.vector_store %arg7[%c0_14, %c0_15], %35 {strides = array<i32>} : memref<8x128xf32, #tpu.memory_space<vmem>>, vector<8x128xf32>,
    return
  }
  func.func @transform_0(%arg0: i32) -> (i32, i32) {
    %c0_i32 = arith.constant 0 : i32
    %c0_i32_0 = arith.constant 0 : i32
    return %arg0, %c0_i32 : i32, i32
  }
  func.func @transform_1(%arg0: i32) -> (i32, i32) {
    %c0_i32 = arith.constant 0 : i32
    %c0_i32_0 = arith.constant 0 : i32
    return %arg0, %c0_i32 : i32, i32
  }
  func.func @transform_2(%arg0: i32) -> (i32, i32) {
    %c0_i32 = arith.constant 0 : i32
    %c0_i32_0 = arith.constant 0 : i32
    %c0_i32_1 = arith.constant 0 : i32
    return %c0_i32, %c0_i32_0 : i32, i32
  }
  func.func @transform_3(%arg0: i32) -> (i32, i32) {
    %c0_i32 = arith.constant 0 : i32
    %c0_i32_0 = arith.constant 0 : i32
    %c0_i32_1 = arith.constant 0 : i32
    return %c0_i32, %c0_i32_0 : i32, i32
  }
  func.func @transform_4(%arg0: i32) -> (i32, i32) {
    %c0_i32 = arith.constant 0 : i32
    %c0_i32_0 = arith.constant 0 : i32
    %c0_i32_1 = arith.constant 0 : i32
    return %c0_i32, %c0_i32_0 : i32, i32
  }
  func.func @transform_5(%arg0: i32) -> (i32, i32) {
    %c0_i32 = arith.constant 0 : i32
    %c0_i32_0 = arith.constant 0 : i32
    %c0_i32_1 = arith.constant 0 : i32
    return %c0_i32, %c0_i32_0 : i32, i32
  }
  func.func @transform_6(%arg0: i32) -> (i32, i32) {
    %c0_i32 = arith.constant 0 : i32
    %c0_i32_0 = arith.constant 0 : i32
    return %arg0, %c0_i32 : i32, i32
  }
}

</mosaic_0001>

<llo_original>
// kernel: tpu_custom_call.1
$region0: #{tpu_custom_call.1}
  #allocation0 [shape = 'u32[]', space=smem, size = 0x4, offset = 0x4, fixed_abs, tag = 'smem constant byte address 0x4 - core index']
  #allocation1 [shape = 'u32[72,128]{1,0:T(1,128)}', space=vmem, size = 0x9000, scoped, tag = 'internal scratch']
  %s0 = inlined_call_operand.hbm [shape: f32[8,16], index: 0, kind: input, shape index: {}]
  %s1 = inlined_call_operand.hbm [shape: f32[8,128], index: 1, kind: input, shape index: {}]
  %s2 = inlined_call_operand.hbm [shape: f32[16,384], index: 2, kind: input, shape index: {}]
  %s3 = inlined_call_operand.hbm [shape: f32[128,384], index: 3, kind: input, shape index: {}]
  %s4 = inlined_call_operand.vmem [shape: f32[1,384], index: 4, kind: input, shape index: {}]
  %s5 = inlined_call_operand.vmem [shape: f32[1,128], index: 5, kind: input, shape index: {}]
  %s6 = inlined_call_operand.hbm [shape: f32[8,128], index: 6, kind: output, shape index: {}]
  %s7 = sld [smem:[#allocation0]]
  $region50: #{tpu_custom_call.1} parent=0
    _
  %s9 = ssub.s32 1, %s7
  %s10 = scalar_select 0, %s9, %s7
  $region1: #{tpu_custom_call.1} parent=0
    #allocation2 [shape = 'u8[4096]{0}', space=vmem, size = 0x1000, scoped, tag = 'input window, operand 0, single buffered']
    #allocation3 [shape = 's32[1]{0}', space=sflag, size = 0x4, scoped, tag = 'scoped memory for tpu_custom_call.1']
    #allocation4 [shape = 's32[1]{0}', space=sflag, size = 0x4, scoped, tag = 'scoped memory for tpu_custom_call.1']
    #allocation5 [shape = 'u8[4096]{0}', space=vmem, size = 0x1000, scoped, tag = 'input window, operand 1, single buffered']
    #allocation6 [shape = 's32[1]{0}', space=sflag, size = 0x4, scoped, tag = 'scoped memory for tpu_custom_call.1']
    #allocation7 [shape = 'u8[24576]{0}', space=vmem, size = 0x6000, scoped, tag = 'input window, operand 2, single buffered']
    #allocation8 [shape = 'u8[196608]{0}', space=vmem, size = 0x30000, scoped, tag = 'input window, operand 3, single buffered']
    #allocation9 [shape = 's32[1]{0}', space=sflag, size = 0x4, scoped, tag = 'scoped memory for tpu_custom_call.1']
    #allocation10 [shape = 'u8[4096]{0}', space=vmem, size = 0x1000, scoped, tag = 'output window, operand 0, single buffered']
    %11 = vsyncpa [#allocation3], 0
    %12 = vsyncpa [#allocation6], 0
    %13 = vsyncpa [#allocation9], 0
    %14 = vsyncpa [#allocation4], 0
    // Predicated region
    $region2: #{tpu_custom_call.1} parent=1 // pred_check
      _
    $region3: #{tpu_custom_call.1} parent=1 // pred_check_branch
      %16 = sbr.rel (0) target = $region5
    $region4: #{tpu_custom_call.1} parent=1 // pred_region
      %18 = vsyncadd [#allocation3], 0
      %s20 = sshll.u32 %s0, 4
      %s21 = int_to_ptr.hbm [resolvable:$true] %s20
      %s22 = sshll.u32 [#allocation2], 4
      %s23 = int_to_ptr.vmem [resolvable:$true] %s22
      %25 = dma.hbm_to_vmem [thread:$0]  %s21, 128, %s23, [#allocation3]
    $region5: #{tpu_custom_call.1} parent=1 // pred_fallthru
      _
    // Predicated region
    $region6: #{tpu_custom_call.1} parent=1 // pred_check
      _
    $region7: #{tpu_custom_call.1} parent=1 // pred_check_branch
      %27 = sbr.rel (0) target = $region9
    $region8: #{tpu_custom_call.1} parent=1 // pred_region
      %29 = vsyncadd [#allocation6], 0
      %s31 = sshll.u32 %s1, 4
      %s32 = int_to_ptr.hbm [resolvable:$true] %s31
      %s33 = sshll.u32 [#allocation5], 4
      %s34 = int_to_ptr.vmem [resolvable:$true] %s33
      %36 = dma.hbm_to_vmem [thread:$0]  %s32, 128, %s34, [#allocation6]
    $region9: #{tpu_custom_call.1} parent=1 // pred_fallthru
      _
    // Predicated region
    $region10: #{tpu_custom_call.1} parent=1 // pred_check
      _
    $region11: #{tpu_custom_call.1} parent=1 // pred_check_branch
      %38 = sbr.rel (0) target = $region13
    $region12: #{tpu_custom_call.1} parent=1 // pred_region
      %40 = vsyncadd [#allocation6], 0
      %s41 = sshll.u32 %s2, 4
      %s42 = int_to_ptr.hbm [resolvable:$true] %s41
      %s43 = sshll.u32 [#allocation7], 4
      %s44 = int_to_ptr.vmem [resolvable:$true] %s43
      %49 = dma.hbm_to_vmem [thread:$0]  %s42, 768, %s44, [#allocation6], 384, 384, 24
    $region13: #{tpu_custom_call.1} parent=1 // pred_fallthru
      _
    // Predicated region
    $region14: #{tpu_custom_call.1} parent=1 // pred_check
      _
    $region15: #{tpu_custom_call.1} parent=1 // pred_check_branch
      %51 = sbr.rel (0) target = $region17
    $region16: #{tpu_custom_call.1} parent=1 // pred_region
      %53 = vsyncadd [#allocation9], 0
      %s54 = sshll.u32 %s3, 4
      %s55 = int_to_ptr.hbm [resolvable:$true] %s54
      %s56 = sshll.u32 [#allocation8], 4
      %s57 = int_to_ptr.vmem [resolvable:$true] %s56
      %62 = dma.hbm_to_vmem [thread:$0]  %s55, 6144, %s57, [#allocation9], 384, 384, 24
    $region17: #{tpu_custom_call.1} parent=1 // pred_fallthru
      _
    // Predicated region
    $region18: #{tpu_custom_call.1} parent=1 // pred_check
      _
    $region19: #{tpu_custom_call.1} parent=1 // pred_check_branch
      %64 = sbr.rel (0) target = $region21
    $region20: #{tpu_custom_call.1} parent=1 // pred_region
      _
    $region21: #{tpu_custom_call.1} parent=1 // pred_fallthru
      _
    // Predicated region
    $region22: #{tpu_custom_call.1} parent=1 // pred_check
      _
    $region23: #{tpu_custom_call.1} parent=1 // pred_check_branch
      %66 = sbr.rel (0) target = $region25
    $region24: #{tpu_custom_call.1} parent=1 // pred_region
      _
    $region25: #{tpu_custom_call.1} parent=1 // pred_fallthru
      _
    // Predicated region
    $region26: #{tpu_custom_call.1} parent=1 // pred_check
      _
    $region27: #{tpu_custom_call.1} parent=1 // pred_check_branch
      %68 = sbr.rel (0) target = $region29
    $region28: #{tpu_custom_call.1} parent=1 // pred_region
      %70 = dma.done [#allocation3], 128
    $region29: #{tpu_custom_call.1} parent=1 // pred_fallthru
      _
    // Predicated region
    $region30: #{tpu_custom_call.1} parent=1 // pred_check
      _
    $region31: #{tpu_custom_call.1} parent=1 // pred_check_branch
      %72 = sbr.rel (0) target = $region33
    $region32: #{tpu_custom_call.1} parent=1 // pred_region
      %74 = dma.done [#allocation6], 128
    $region33: #{tpu_custom_call.1} parent=1 // pred_fallthru
      _
    // Predicated region
    $region34: #{tpu_custom_call.1} parent=1 // pred_check
      _
    $region35: #{tpu_custom_call.1} parent=1 // pred_check_branch
      %76 = sbr.rel (0) target = $region37
    $region36: #{tpu_custom_call.1} parent=1 // pred_region
      %78 = dma.done [#allocation6], 768
    $region37: #{tpu_custom_call.1} parent=1 // pred_fallthru
      _
    // Predicated region
    $region38: #{tpu_custom_call.1} parent=1 // pred_check
      _
    $region39: #{tpu_custom_call.1} parent=1 // pred_check_branch
      %80 = sbr.rel (0) target = $region41
    $region40: #{tpu_custom_call.1} parent=1 // pred_region
      %82 = dma.done [#allocation9], 6144
    $region41: #{tpu_custom_call.1} parent=1 // pred_fallthru
      _
    %v83 = vld [vmem:[#allocation2] sm:$0xff]
    %v84 = vld [vmem:[#allocation5] sm:$0xff]
    %v85 = vld [vmem:[#allocation7] sm:$0xff]
    %v86 = vld [vmem:[#allocation7 + $0x8] sm:$0xff]
    %v87 = vld [vmem:[#allocation7 + $0x10] sm:$0xff]
    %v88 = vld [vmem:[#allocation7 + $0x18] sm:$0xff]
    %v89 = vld [vmem:[#allocation7 + $0x20] sm:$0xff]
    %v90 = vld [vmem:[#allocation7 + $0x28] sm:$0xff]
    %v91 = vld [vmem:[%s4] sm:$0x7]
    %v93 = vperm.slane %v91, 0
    %v94 = vperm.slane %v91, 1
    %v95 = vperm.slane %v91, 2
    %vm99 = vcmask 130048
    %v101 = vsel %vm99, %v83, 0
    %103 = vmatpush.msra.mxu0 0.0
    %104 = vmatpush.msra.mxu0 0.0
    %105 = vmatpush.msra.mxu0 0.0
    %106 = vmatpush.msra.mxu0 0.0
    %107 = vmatpush.msra.mxu0 0.0
    %108 = vmatpush.msra.mxu0 0.0
    %109 = vmatpush.msra.mxu0 0.0
    %110 = vmatpush.msra.mxu0 0.0
    %111 = vmatpush.msra.mxu0 0.0
    %112 = vmatpush.msra.mxu0 0.0
    %113 = vmatpush.msra.mxu0 0.0
    %114 = vmatpush.msra.mxu0 0.0
    %115 = vmatpush.msra.mxu0 0.0
    %116 = vmatpush.msra.mxu0 0.0
    %117 = vmatpush.msra.mxu0 %v88
    %118 = vmatpush.msra.mxu0 %v85
    %119 = vmatmul.f32.gmra.mxu0 %v101
    %v120 = vpop.f32.mrf.mxu0
    %v121 = vadd.f32 %v93, %v120
    %122 = vdwg.mxu0
    %123 = vmatpush.msra.mxu0 0.0
    %124 = vmatpush.msra.mxu0 0.0
    %125 = vmatpush.msra.mxu0 0.0
    %126 = vmatpush.msra.mxu0 0.0
    %127 = vmatpush.msra.mxu0 0.0
    %128 = vmatpush.msra.mxu0 0.0
    %129 = vmatpush.msra.mxu0 0.0
    %130 = vmatpush.msra.mxu0 0.0
    %131 = vmatpush.msra.mxu0 0.0
    %132 = vmatpush.msra.mxu0 0.0
    %133 = vmatpush.msra.mxu0 0.0
    %134 = vmatpush.msra.mxu0 0.0
    %135 = vmatpush.msra.mxu0 0.0
    %136 = vmatpush.msra.mxu0 0.0
    %137 = vmatpush.msra.mxu0 %v89
    %138 = vmatpush.msra.mxu0 %v86
    %139 = vmatmul.f32.gmra.mxu0 %v101
    %v140 = vpop.f32.mrf.mxu0
    %v141 = vadd.f32 %v94, %v140
    %142 = vdwg.mxu0
    %143 = vmatpush.msra.mxu0 0.0
    %144 = vmatpush.msra.mxu0 0.0
    %145 = vmatpush.msra.mxu0 0.0
    %146 = vmatpush.msra.mxu0 0.0
    %147 = vmatpush.msra.mxu0 0.0
    %148 = vmatpush.msra.mxu0 0.0
    %149 = vmatpush.msra.mxu0 0.0
    %150 = vmatpush.msra.mxu0 0.0
    %151 = vmatpush.msra.mxu0 0.0
    %152 = vmatpush.msra.mxu0 0.0
    %153 = vmatpush.msra.mxu0 0.0
    %154 = vmatpush.msra.mxu0 0.0
    %155 = vmatpush.msra.mxu0 0.0
    %156 = vmatpush.msra.mxu0 0.0
    %157 = vmatpush.msra.mxu0 %v90
    %158 = vmatpush.msra.mxu0 %v87
    %159 = vmatmul.f32.gmra.mxu0 %v101
    %v160 = vpop.f32.mrf.mxu0
    %v161 = vadd.f32 %v95, %v160
    %162 = vdwg.mxu0
    %v163 = vld [vmem:[#allocation8] sm:$0xff]
    %v164 = vld [vmem:[#allocation8 + $0x8] sm:$0xff]
    %v165 = vld [vmem:[#allocation8 + $0x10] sm:$0xff]
    %v166 = vld [vmem:[#allocation8 + $0x18] sm:$0xff]
    %v167 = vld [vmem:[#allocation8 + $0x20] sm:$0xff]
    %v168 = vld [vmem:[#allocation8 + $0x28] sm:$0xff]
    %v169 = vld [vmem:[#allocation8 + $0x30] sm:$0xff]
    %v170 = vld [vmem:[#allocation8 + $0x38] sm:$0xff]
    %v171 = vld [vmem:[#allocation8 + $0x40] sm:$0xff]
    %v172 = vld [vmem:[#allocation8 + $0x48] sm:$0xff]
    %v173 = vld [vmem:[#allocation8 + $0x50] sm:$0xff]
    %v174 = vld [vmem:[#allocation8 + $0x58] sm:$0xff]
    %v175 = vld [vmem:[#allocation8 + $0x60] sm:$0xff]
    %v176 = vld [vmem:[#allocation8 + $0x68] sm:$0xff]
    %v177 = vld [vmem:[#allocation8 + $0x70] sm:$0xff]
    %v178 = vld [vmem:[#allocation8 + $0x78] sm:$0xff]
    %v179 = vld [vmem:[#allocation8 + $0x80] sm:$0xff]
    %v180 = vld [vmem:[#allocation8 + $0x88] sm:$0xff]
    %v181 = vld [vmem:[#allocation8 + $0x90] sm:$0xff]
    %v182 = vld [vmem:[#allocation8 + $0x98] sm:$0xff]
    %v183 = vld [vmem:[#allocation8 + $0xa0] sm:$0xff]
    %v184 = vld [vmem:[#allocation8 + $0xa8] sm:$0xff]
    %v185 = vld [vmem:[#allocation8 + $0xb0] sm:$0xff]
    %v186 = vld [vmem:[#allocation8 + $0xb8] sm:$0xff]
    %v187 = vld [vmem:[#allocation8 + $0xc0] sm:$0xff]
    %v188 = vld [vmem:[#allocation8 + $0xc8] sm:$0xff]
    %v189 = vld [vmem:[#allocation8 + $0xd0] sm:$0xff]
    %v190 = vld [vmem:[#allocation8 + $0xd8] sm:$0xff]
    %v191 = vld [vmem:[#allocation8 + $0xe0] sm:$0xff]
    %v192 = vld [vmem:[#allocation8 + $0xe8] sm:$0xff]
    %v193 = vld [vmem:[#allocation8 + $0xf0] sm:$0xff]
    %v194 = vld [vmem:[#allocation8 + $0xf8] sm:$0xff]
    %v195 = vld [vmem:[#allocation8 + $0x100] sm:$0xff]
    %v196 = vld [vmem:[#allocation8 + $0x108] sm:$0xff]
    %v197 = vld [vmem:[#allocation8 + $0x110] sm:$0xff]
    %v198 = vld [vmem:[#allocation8 + $0x118] sm:$0xff]
    %v199 = vld [vmem:[#allocation8 + $0x120] sm:$0xff]
    %v200 = vld [vmem:[#allocation8 + $0x128] sm:$0xff]
    %v201 = vld [vmem:[#allocation8 + $0x130] sm:$0xff]
    %v202 = vld [vmem:[#allocation8 + $0x138] sm:$0xff]
    %v203 = vld [vmem:[#allocation8 + $0x140] sm:$0xff]
    %v204 = vld [vmem:[#allocation8 + $0x148] sm:$0xff]
    %v205 = vld [vmem:[#allocation8 + $0x150] sm:$0xff]
    %v206 = vld [vmem:[#allocation8 + $0x158] sm:$0xff]
    %v207 = vld [vmem:[#allocation8 + $0x160] sm:$0xff]
    %v208 = vld [vmem:[#allocation8 + $0x168] sm:$0xff]
    %v209 = vld [vmem:[#allocation8 + $0x170] sm:$0xff]
    %v210 = vld [vmem:[#allocation8 + $0x178] sm:$0xff]
    %211 = vmatpush.msra.mxu0 %v208
    %212 = vmatpush.msra.mxu0 %v205
    %213 = vmatpush.msra.mxu0 %v202
    %214 = vmatpush.msra.mxu0 %v199
    %215 = vmatpush.msra.mxu0 %v196
    %216 = vmatpush.msra.mxu0 %v193
    %217 = vmatpush.msra.mxu0 %v190
    %218 = vmatpush.msra.mxu0 %v187
    %219 = vmatpush.msra.mxu0 %v184
    %220 = vmatpush.msra.mxu0 %v181
    %221 = vmatpush.msra.mxu0 %v178
    %222 = vmatpush.msra.mxu0 %v175
    %223 = vmatpush.msra.mxu0 %v172
    %224 = vmatpush.msra.mxu0 %v169
    %225 = vmatpush.msra.mxu0 %v166
    %226 = vmatpush.msra.mxu0 %v163
    %227 = vmatmul.f32.gmra.mxu0 %v84
    %v228 = vpop.f32.mrf.mxu0
    %v229 = vadd.f32 0.0, %v228
    %230 = vdwg.mxu0
    %231 = vmatpush.msra.mxu0 %v209
    %232 = vmatpush.msra.mxu0 %v206
    %233 = vmatpush.msra.mxu0 %v203
    %234 = vmatpush.msra.mxu0 %v200
    %235 = vmatpush.msra.mxu0 %v197
    %236 = vmatpush.msra.mxu0 %v194
    %237 = vmatpush.msra.mxu0 %v191
    %238 = vmatpush.msra.mxu0 %v188
    %239 = vmatpush.msra.mxu0 %v185
    %240 = vmatpush.msra.mxu0 %v182
    %241 = vmatpush.msra.mxu0 %v179
    %242 = vmatpush.msra.mxu0 %v176
    %243 = vmatpush.msra.mxu0 %v173
    %244 = vmatpush.msra.mxu0 %v170
    %245 = vmatpush.msra.mxu0 %v167
    %246 = vmatpush.msra.mxu0 %v164
    %247 = vmatmul.f32.gmra.mxu0 %v84
    %v248 = vpop.f32.mrf.mxu0
    %v249 = vadd.f32 0.0, %v248
    %250 = vdwg.mxu0
    %251 = vmatpush.msra.mxu0 %v210
    %252 = vmatpush.msra.mxu0 %v207
    %253 = vmatpush.msra.mxu0 %v204
    %254 = vmatpush.msra.mxu0 %v201
    %255 = vmatpush.msra.mxu0 %v198
    %256 = vmatpush.msra.mxu0 %v195
    %257 = vmatpush.msra.mxu0 %v192
    %258 = vmatpush.msra.mxu0 %v189
    %259 = vmatpush.msra.mxu0 %v186
    %260 = vmatpush.msra.mxu0 %v183
    %261 = vmatpush.msra.mxu0 %v180
    %262 = vmatpush.msra.mxu0 %v177
    %263 = vmatpush.msra.mxu0 %v174
    %264 = vmatpush.msra.mxu0 %v171
    %265 = vmatpush.msra.mxu0 %v168
    %266 = vmatpush.msra.mxu0 %v165
    %267 = vmatmul.f32.gmra.mxu0 %v84
    %v268 = vpop.f32.mrf.mxu0
    %v269 = vadd.f32 0.0, %v268
    %270 = vdwg.mxu0
    %v271 = vadd.f32 %v121, %v229
    %v272 = vxor.u32 %v271, 2147483648
    %v273 = vmul.f32 %v272, 1.442695
    %v274 = vpow.pop %v273
    %v275 = vadd.f32 %v274, 1.0
    %v276 = vrcp.pop %v275
    %v277 = vmul.f32 %v275, %v276
    %v278 = vsub.f32 1.0, %v277
    %v279 = vmul.f32 %v276, %v278
    %v280 = vadd.f32 %v276, %v279
    %vm281 = vweird.f32 %v275
    %vm282 = vweird.f32 %v276
    %vm283 = vmor %vm281, %vm282
    %v284 = vsel %vm283, %v276, %v280
    %v285 = vand.u32 2147483647, %v275
    %vm286 = vcmp.eq.f32.partialorder %v285, 8.507059e+37
    %v287 = vand.u32 %v275, 2147483648
    %v288 = vor.u32 1.1754944e-38, %v287
    %v289 = vsel %vm286, %v288, %v284
    %v290 = vmul.f32 1.0, %v289
    %v291 = vadd.f32 %v141, %v249
    %v292 = vxor.u32 %v291, 2147483648
    %v293 = vmul.f32 %v292, 1.442695
    %v294 = vpow.pop %v293
    %v295 = vadd.f32 %v294, 1.0
    %v296 = vrcp.pop %v295
    %v297 = vmul.f32 %v295, %v296
    %v298 = vsub.f32 1.0, %v297
    %v299 = vmul.f32 %v296, %v298
    %v300 = vadd.f32 %v296, %v299
    %vm301 = vweird.f32 %v295
    %vm302 = vweird.f32 %v296
    %vm303 = vmor %vm301, %vm302
    %v304 = vsel %vm303, %v296, %v300
    %v305 = vand.u32 2147483647, %v295
    %vm306 = vcmp.eq.f32.partialorder %v305, 8.507059e+37
    %v307 = vand.u32 %v295, 2147483648
    %v308 = vor.u32 1.1754944e-38, %v307
    %v309 = vsel %vm306, %v308, %v304
    %v310 = vmul.f32 1.0, %v309
    %v311 = vld [vmem:[%s5] sm:$0x1]
    %v313 = vperm.slane %v311, 0
    %v315 = vadd.f32 %v269, %v313
    %v316 = vmul.f32 %v290, %v315
    %v317 = vadd.f32 %v161, %v316
    %v318 = vtanh.pop %v317
    %v319 = vsub.f32 %v84, %v318
    %v320 = vmul.f32 %v310, %v319
    %v321 = vadd.f32 %v318, %v320
    %322 = vst [vmem:[#allocation10] sm:$0xff] %v321
    // Predicated region
    $region42: #{tpu_custom_call.1} parent=1 // pred_check
      _
    $region43: #{tpu_custom_call.1} parent=1 // pred_check_branch
      %324 = sbr.rel (0) target = $region45
    $region44: #{tpu_custom_call.1} parent=1 // pred_region
      %326 = vsyncadd [#allocation4], 0
      %s328 = sshll.u32 [#allocation10], 4
      %s329 = int_to_ptr.vmem [resolvable:$true] %s328
      %s330 = sshll.u32 %s6, 4
      %s331 = int_to_ptr.hbm [resolvable:$true] %s330
      %333 = dma.vmem_to_hbm [thread:$0]  %s329, 128, %s331, [#allocation4]
    $region45: #{tpu_custom_call.1} parent=1 // pred_fallthru
      _
    // Predicated region
    $region46: #{tpu_custom_call.1} parent=1 // pred_check
      _
    $region47: #{tpu_custom_call.1} parent=1 // pred_check_branch
      %335 = sbr.rel (0) target = $region49
    $region48: #{tpu_custom_call.1} parent=1 // pred_region
      %337 = dma.done [#allocation4], 128
    $region49: #{tpu_custom_call.1} parent=1 // pred_fallthru
      _
    %338 = vsyncpa [#allocation3], 1
    %339 = vsyncpa [#allocation6], 1
    %340 = vsyncpa [#allocation9], 1
    %341 = vsyncpa [#allocation4], 1

</llo_original>
